<compile_context>
chip_gen: v5e
topology: v5e:2x2
jax: 0.10.0
libtpu: 0.0.40
codegen_flags: <defaults>
</compile_context>

<pallas_src>
import math
import jax
import jax.numpy as jnp
from jax.experimental import pallas as pl
from jax.experimental.pallas import tpu as pltpu


def _round_up(x, m):
    return ((x + m - 1) // m) * m


def _sublane_multiple(dtype):
    # f32 -> 8, bf16 -> 16, int8/fp8 -> 32 (sub-32-bit dtypes pack along sublanes).
    return max(8, 32 // jnp.dtype(dtype).itemsize)


def _vmem_budget_bytes():
    # ~3/4 of physical VMEM: ~96 MiB on v5e/v6e (128 MiB), ~48 MiB on v7x (64 MiB).
    cap = None
    try:
        info = pltpu.get_tpu_info()
        cap = getattr(info, "vmem_capacity_bytes", None)
    except Exception:
        cap = None
    if not cap:
        cap = 64 * 1024 * 1024  # conservative fallback (v7x-sized)
    return (int(cap) * 3) // 4


def prepare_weight(weight, dtype=None):
    """One-time (init-time) weight prep: PyTorch (out_feats, in_feats) -> (in_feats, out_feats).

    Doing the transpose (and optional bf16 cast) once here keeps the in-kernel
    contraction in (tm, K) x (K, tn) form: no per-tile XLU transpose, N lane-dense.
    """
    w_t = jnp.asarray(weight).T
    if dtype is not None:
        w_t = w_t.astype(dtype)
    return jnp.asarray(w_t)


def _linear_kernel_fullk(x_ref, w_ref, o_ref):
    # x_ref: (tm, K), w_ref: (K, tn), o_ref: (tm, tn)
    o_ref[...] = jnp.dot(
        x_ref[...], w_ref[...], preferred_element_type=jnp.float32
    ).astype(o_ref.dtype)


def _linear_kernel_ktiled(x_ref, w_ref, o_ref, acc_ref):
    # Canonical reduction: f32 VMEM accumulator, zero at k==0, store at k==last.
    @pl.when(pl.program_id(2) == 0)
    def _():
        acc_ref[...] = jnp.zeros_like(acc_ref)

    acc_ref[...] += jnp.dot(
        x_ref[...], w_ref[...], preferred_element_type=jnp.float32
    )

    @pl.when(pl.program_id(2) == pl.num_programs(2) - 1)
    def _():
        o_ref[...] = acc_ref[...].astype(o_ref.dtype)


def linear_projection(x, w_t, dropout_p=0.0, *,
                      tm=None, tn=None, tk=None, force_k_grid=False):
    """Equivalent of LinearProjection.forward (bias=False, dropout p=0.0 -> identity).

    x:   (..., in_feats)
    w_t: (in_feats, out_feats)   -- use prepare_weight() once on the PyTorch weight.
    returns (..., out_feats) in x.dtype
    """
    *lead, in_feats = x.shape
    assert w_t.shape[0] == in_feats, "w_t must be (in_feats, out_feats); use prepare_weight()"
    out_feats = w_t.shape[1]
    m = int(math.prod(lead)) if lead else 1
    x2d = x.reshape(m, in_feats)

    x_b = jnp.dtype(x.dtype).itemsize
    w_b = jnp.dtype(w_t.dtype).itemsize
    o_b = x_b  # output keeps x.dtype

    budget = _vmem_budget_bytes()
    big_vmem = budget >= 80 * 1024 * 1024  # v5e / v6e (128 MiB physical VMEM)
    if tm is None:
        tm = 512 if big_vmem else 256
    if tn is None:
        tn = 512 if big_vmem else 256
    if tk is None:
        tk = 1024 if big_vmem else 512

    # Dtype-aware sublane-aligned M tile, lane-dense (128-multiple) N tile.
    # Tiles never exceed the array extent; ragged edges are boundary blocks
    # (Pallas masks OOB output stores; OOB M rows / N cols of the inputs only feed
    # OOB outputs, so operand padding on M/N is unnecessary).
    sub = _sublane_multiple(x.dtype)
    tm = _round_up(tm, sub)
    tn = _round_up(tn, 128)
    tm_eff = min(tm, (m // sub) * sub) if m >= sub else m
    tn_eff = min(tn, (out_feats // 128) * 128) if out_feats >= 128 else out_feats

    m_tiles = pl.cdiv(m, tm_eff)
    n_tiles = pl.cdiv(out_feats, tn_eff)

    # K gets its own grid axis only if double-buffered full-K operand tiles plus a
    # double-buffered output tile would not fit the VMEM budget.
    full_k_bytes = (2 * (tm_eff * in_feats * x_b + in_feats * tn_eff * w_b)
                    + 2 * tm_eff * tn_eff * o_b)
    use_k_grid = force_k_grid or full_k_bytes > (budget * 4) // 5

    # Grid order: the operand indexed by the OUTER axis is fetched once; the other is
    # re-streamed once per outer tile. Pick the order that minimizes HBM traffic, then
    # make sure the outer (megacore-sharded) axis has >= 2 blocks when possible.
    x_bytes_total = m * in_feats * x_b
    w_bytes_total = in_feats * out_feats * w_b
    traffic_m_outer = x_bytes_total + m_tiles * w_bytes_total   # grid (M, N), N inner
    traffic_n_outer = n_tiles * x_bytes_total + w_bytes_total   # grid (N, M), M inner
    m_outer = traffic_m_outer <= traffic_n_outer
    if m_outer and m_tiles == 1 and n_tiles > 1:
        m_outer = False
    elif (not m_outer) and n_tiles == 1 and m_tiles > 1:
        m_outer = True

    cost = pl.CostEstimate(
        flops=2 * m * out_feats * in_feats,
        transcendentals=0,
        bytes_accessed=x_bytes_total + w_bytes_total + m * out_feats * o_b,
    )
    cparams = dict(vmem_limit_bytes=budget)

    if not use_k_grid:
        if m_outer:
            grid = (m_tiles, n_tiles)
            x_map = lambda i, j: (i, 0)
            w_map = lambda i, j: (0, j)
            o_map = lambda i, j: (i, j)
        else:
            grid = (n_tiles, m_tiles)
            x_map = lambda j, i: (i, 0)
            w_map = lambda j, i: (0, j)
            o_map = lambda j, i: (i, j)

        out2d = pl.pallas_call(
            _linear_kernel_fullk,
            out_shape=jax.ShapeDtypeStruct((m, out_feats), x.dtype),
            grid_spec=pltpu.PrefetchScalarGridSpec(
                num_scalar_prefetch=0,
                grid=grid,
                in_specs=[
                    pl.BlockSpec((tm_eff, in_feats), x_map),
                    pl.BlockSpec((in_feats, tn_eff), w_map),
                ],
                out_specs=pl.BlockSpec((tm_eff, tn_eff), o_map),
            ),
            compiler_params=pltpu.CompilerParams(
                dimension_semantics=("parallel", "parallel"), **cparams),
            cost_estimate=cost,
        )(x2d, w_t)
    else:
        tk_eff = min(_round_up(tk, 128), _round_up(in_feats, 128))
        k_pad = (-in_feats) % tk_eff
        x_p, w_p = x2d, w_t
        if k_pad:
            # Only the reduction axis needs zero padding for correctness (OOB K
            # elements would otherwise pollute in-bounds outputs).
            x_p = jnp.pad(x2d, ((0, 0), (0, k_pad)))
            w_p = jnp.pad(w_t, ((0, k_pad), (0, 0)))
        k_tiles = (in_feats + k_pad) // tk_eff

        if m_outer:
            grid = (m_tiles, n_tiles, k_tiles)
            x_map = lambda i, j, k: (i, k)
            w_map = lambda i, j, k: (k, j)
            o_map = lambda i, j, k: (i, j)
        else:
            grid = (n_tiles, m_tiles, k_tiles)
            x_map = lambda j, i, k: (i, k)
            w_map = lambda j, i, k: (k, j)
            o_map = lambda j, i, k: (i, j)

        # TODO(synk): on v7x, consider pipeline_mode=pl.Buffered(3) on the streamed
        # weight BlockSpec to deepen DMA pipelining between k-steps.
        out2d = pl.pallas_call(
            _linear_kernel_ktiled,
            out_shape=jax.ShapeDtypeStruct((m, out_feats), x.dtype),
            grid_spec=pltpu.PrefetchScalarGridSpec(
                num_scalar_prefetch=0,
                grid=grid,
                in_specs=[
                    pl.BlockSpec((tm_eff, tk_eff), x_map),
                    pl.BlockSpec((tk_eff, tn_eff), w_map),
                ],
                out_specs=pl.BlockSpec((tm_eff, tn_eff), o_map),
                scratch_shapes=[pltpu.VMEM((tm_eff, tn_eff), jnp.float32)],
            ),
            compiler_params=pltpu.CompilerParams(
                dimension_semantics=("parallel", "parallel", "arbitrary"),
                **cparams),
            cost_estimate=cost,
        )(x_p, w_p)

    # proj_dropout with p=0.0 is the identity (both train and eval).
    # TODO(synk): fuse stochastic dropout (pltpu.prng_seed + prng_random_bits) into
    # the kernel epilogue if dropout_p > 0 is ever needed.
    del dropout_p

    return out2d.reshape(*lead, out_feats)


def init_linear_weight(key, in_feats, out_feats, dtype=jnp.float32):
    # Matches nn.Linear default init: U(-1/sqrt(in_feats), 1/sqrt(in_feats)).
    bound = 1.0 / math.sqrt(in_feats)
    return jax.random.uniform(
        key, (out_feats, in_feats), dtype=dtype, minval=-bound, maxval=bound
    )


if __name__ == "__main__":
    key = jax.random.PRNGKey(0)
    kx1, kw1, kx2, kw2, kx3, kw3 = jax.random.split(key, 6)

    # Case 1: small module-like shapes (single tile, out_feats < 128).
    batch, seq, in_feats, out_feats = 2, 8, 32, 64
    x1 = jax.random.normal(kx1, (batch, seq, in_feats), dtype=jnp.float32)
    w1 = init_linear_weight(kw1, in_feats, out_feats)
    out1 = jax.block_until_ready(linear_projection(x1, prepare_weight(w1)))
    ref1 = jnp.einsum("bsk,nk->bsn", x1, w1)
    assert out1.shape == (batch, seq, out_feats)
    assert jnp.allclose(out1, ref1, atol=1e-4, rtol=1e-4)

    # Case 2: K-tiled accumulator path (forced), multiple k-steps.
    b2, s2, k2, n2 = 4, 64, 256, 384
    x2 = jax.random.normal(kx2, (b2, s2, k2), dtype=jnp.float32)
    w2 = init_linear_weight(kw2, k2, n2)
    out2 = jax.block_until_ready(
        linear_projection(x2, prepare_weight(w2), tk=128, force_k_grid=True))
    ref2 = jnp.einsum("bsk,nk->bsn", x2, w2)
    assert out2.shape == (b2, s2, n2)
    assert jnp.allclose(out2, ref2, atol=1e-4, rtol=1e-4)

    # Case 3: ragged M and N (no operand padding; boundary blocks masked by Pallas).
    b3, s3, k3, n3 = 2, 12, 64, 192
    x3 = jax.random.normal(kx3, (b3, s3, k3), dtype=jnp.float32)
    w3 = init_linear_weight(kw3, k3, n3)
    out3 = jax.block_until_ready(
        linear_projection(x3, prepare_weight(w3), tm=16, tn=128))
    ref3 = jnp.einsum("bsk,nk->bsn", x3, w3)
    assert out3.shape == (b3, s3, n3)
    assert jnp.allclose(out3, ref3, atol=1e-4, rtol=1e-4)

    print("KERNEL_OK")
</pallas_src>

<mosaic_0001>
module attributes {stable_mosaic.version = 11 : i64} {
  func.func @_linear_kernel_fullk(%arg0: i32, %arg1: i32, %arg2: memref<16x32xf32, #tpu.memory_space<vmem>>, %arg3: memref<32x64xf32, #tpu.memory_space<vmem>>, %arg4: memref<16x64xf32, #tpu.memory_space<vmem>>) attributes {dimension_semantics = [#tpu.dimension_semantics<parallel>, #tpu.dimension_semantics<parallel>], iteration_bounds = array<i64: 1, 1>, scalar_prefetch = 0 : i64, scratch_operands = 0 : i64, tpu.core_type = #tpu.core_type<tc>, window_params = [{transform_indices = @transform_0, window_bounds = array<i64: 16, 32>}, {transform_indices = @transform_1, window_bounds = array<i64: 32, 64>}, {transform_indices = @transform_2, window_bounds = array<i64: 16, 64>}]} {
    %c0 = arith.constant 0 : index
    %c0_0 = arith.constant 0 : index
    %0 = vector.load %arg2[%c0, %c0_0] : memref<16x32xf32, #tpu.memory_space<vmem>>, vector<16x32xf32>
    %c0_1 = arith.constant 0 : index
    %c0_2 = arith.constant 0 : index
    %1 = vector.load %arg3[%c0_1, %c0_2] : memref<32x64xf32, #tpu.memory_space<vmem>>, vector<32x64xf32>
    %cst = arith.constant dense<0.000000e+00> : vector<16x64xf32>
    %2 = tpu.matmul %0, %1, %cst {dimension_numbers = #tpu.dot_dimension_numbers<[1], [0], [0], [1], [0, 0, 1, 1], [], []>} : vector<16x32xf32>, vector<32x64xf32>, vector<16x64xf32> -> vector<16x64xf32>
    %c0_3 = arith.constant 0 : index
    %c0_4 = arith.constant 0 : index
    %3 = vector.load %arg4[%c0_3, %c0_4] : memref<16x64xf32, #tpu.memory_space<vmem>>, vector<16x64xf32>
    tpu.vector_store %arg4[%c0_3, %c0_4], %2 {strides = array<i32>} : memref<16x64xf32, #tpu.memory_space<vmem>>, vector<16x64xf32>,
    return
  }
  func.func @transform_0(%arg0: i32, %arg1: i32) -> (i32, i32) {
    %c0_i32 = arith.constant 0 : i32
    %c0_i32_0 = arith.constant 0 : i32
    return %arg0, %c0_i32 : i32, i32
  }
  func.func @transform_1(%arg0: i32, %arg1: i32) -> (i32, i32) {
    %c0_i32 = arith.constant 0 : i32
    %c0_i32_0 = arith.constant 0 : i32
    return %c0_i32, %arg1 : i32, i32
  }
  func.func @transform_2(%arg0: i32, %arg1: i32) -> (i32, i32) {
    %c0_i32 = arith.constant 0 : i32
    return %arg0, %arg1 : i32, i32
  }
}

</mosaic_0001>

<llo_original>
// kernel: tpu_custom_call.1
$region0: #{tpu_custom_call.1}
  #allocation0 [shape = 'u32[]', space=smem, size = 0x4, offset = 0x4, fixed_abs, tag = 'smem constant byte address 0x4 - core index']
  #allocation1 [shape = 'u32[72,128]{1,0:T(1,128)}', space=vmem, size = 0x9000, scoped, tag = 'internal scratch']
  %s0 = inlined_call_operand.hbm [shape: f32[16,32], index: 0, kind: input, shape index: {}]
  %s1 = inlined_call_operand.hbm [shape: f32[32,64], index: 1, kind: input, shape index: {}]
  %s2 = inlined_call_operand.hbm [shape: f32[16,64], index: 2, kind: output, shape index: {}]
  %s3 = sld [smem:[#allocation0]]
  $region26: #{tpu_custom_call.1} parent=0
    _
  %s5 = ssub.s32 1, %s3
  %s6 = scalar_select 0, %s5, %s3
  $region1: #{tpu_custom_call.1} parent=0
    #allocation2 [shape = 'u8[8192]{0}', space=vmem, size = 0x2000, scoped, tag = 'input window, operand 0, single buffered']
    #allocation3 [shape = 's32[1]{0}', space=sflag, size = 0x4, scoped, tag = 'scoped memory for tpu_custom_call.1']
    #allocation4 [shape = 's32[1]{0}', space=sflag, size = 0x4, scoped, tag = 'scoped memory for tpu_custom_call.1']
    #allocation5 [shape = 'u8[16384]{0}', space=vmem, size = 0x4000, scoped, tag = 'input window, operand 1, single buffered']
    #allocation6 [shape = 's32[1]{0}', space=sflag, size = 0x4, scoped, tag = 'scoped memory for tpu_custom_call.1']
    #allocation7 [shape = 'u8[8192]{0}', space=vmem, size = 0x2000, scoped, tag = 'output window, operand 0, single buffered']
    %7 = vsyncpa [#allocation3], 0
    %8 = vsyncpa [#allocation6], 0
    %9 = vsyncpa [#allocation4], 0
    // Predicated region
    $region2: #{tpu_custom_call.1} parent=1 // pred_check
      _
    $region3: #{tpu_custom_call.1} parent=1 // pred_check_branch
      %11 = sbr.rel (0) target = $region5
    $region4: #{tpu_custom_call.1} parent=1 // pred_region
      %13 = vsyncadd [#allocation3], 0
      %s14 = sshll.u32 %s0, 4
      %s15 = int_to_ptr.hbm [resolvable:$true] %s14
      %s16 = sshll.u32 [#allocation2], 4
      %s17 = int_to_ptr.vmem [resolvable:$true] %s16
      %22 = dma.hbm_to_vmem [thread:$0]  %s15, 256, %s17, [#allocation3], 128, 128, 8
    $region5: #{tpu_custom_call.1} parent=1 // pred_fallthru
      _
    // Predicated region
    $region6: #{tpu_custom_call.1} parent=1 // pred_check
      _
    $region7: #{tpu_custom_call.1} parent=1 // pred_check_branch
      %24 = sbr.rel (0) target = $region9
    $region8: #{tpu_custom_call.1} parent=1 // pred_region
      %26 = vsyncadd [#allocation6], 0
      %s27 = sshll.u32 %s1, 4
      %s28 = int_to_ptr.hbm [resolvable:$true] %s27
      %s29 = sshll.u32 [#allocation5], 4
      %s30 = int_to_ptr.vmem [resolvable:$true] %s29
      %35 = dma.hbm_to_vmem [thread:$0]  %s28, 512, %s30, [#allocation6], 128, 128, 8
    $region9: #{tpu_custom_call.1} parent=1 // pred_fallthru
      _
    // Predicated region
    $region10: #{tpu_custom_call.1} parent=1 // pred_check
      _
    $region11: #{tpu_custom_call.1} parent=1 // pred_check_branch
      %37 = sbr.rel (0) target = $region13
    $region12: #{tpu_custom_call.1} parent=1 // pred_region
      %39 = dma.done [#allocation3], 256
    $region13: #{tpu_custom_call.1} parent=1 // pred_fallthru
      _
    // Predicated region
    $region14: #{tpu_custom_call.1} parent=1 // pred_check
      _
    $region15: #{tpu_custom_call.1} parent=1 // pred_check_branch
      %41 = sbr.rel (0) target = $region17
    $region16: #{tpu_custom_call.1} parent=1 // pred_region
      %43 = dma.done [#allocation6], 512
    $region17: #{tpu_custom_call.1} parent=1 // pred_fallthru
      _
    %v44 = vld [vmem:[#allocation2] sm:$0xff]
    %v45 = vld [vmem:[#allocation2 + $0x8] sm:$0xff]
    %v46 = vld [vmem:[#allocation5] sm:$0xff]
    %v47 = vld [vmem:[#allocation5 + $0x8] sm:$0xff]
    %v48 = vld [vmem:[#allocation5 + $0x10] sm:$0xff]
    %v49 = vld [vmem:[#allocation5 + $0x18] sm:$0xff]
    %vm50 = vcmask 261120
    %v52 = vsel %vm50, %v44, 0
    %v55 = vsel %vm50, %v45, 0
    %57 = vmatpush.msra.mxu0 0.0
    %58 = vmatpush.msra.mxu0 0.0
    %59 = vmatpush.msra.mxu0 0.0
    %60 = vmatpush.msra.mxu0 0.0
    %61 = vmatpush.msra.mxu0 0.0
    %62 = vmatpush.msra.mxu0 0.0
    %63 = vmatpush.msra.mxu0 0.0
    %64 = vmatpush.msra.mxu0 0.0
    %65 = vmatpush.msra.mxu0 0.0
    %66 = vmatpush.msra.mxu0 0.0
    %67 = vmatpush.msra.mxu0 0.0
    %68 = vmatpush.msra.mxu0 0.0
    %69 = vmatpush.msra.mxu0 %v49
    %70 = vmatpush.msra.mxu0 %v48
    %71 = vmatpush.msra.mxu0 %v47
    %72 = vmatpush.msra.mxu0 %v46
    %73 = vmatmul.f32.gmra.mxu0 %v52
    %v74 = vpop.f32.mrf.mxu0
    %v75 = vadd.f32 0.0, %v74
    %76 = vmatmul.f32.gmra.mxu0 %v55
    %v77 = vpop.f32.mrf.mxu0
    %v78 = vadd.f32 0.0, %v77
    %79 = vdwg.mxu0
    %vm80 = vcmask 523264
    %81 = vst.msk [vmem:[#allocation7] sm:$0xff] %vm80, %v75
    %82 = vst.msk [vmem:[#allocation7 + $0x8] sm:$0xff] %vm80, %v78
    // Predicated region
    $region18: #{tpu_custom_call.1} parent=1 // pred_check
      _
    $region19: #{tpu_custom_call.1} parent=1 // pred_check_branch
      %84 = sbr.rel (0) target = $region21
    $region20: #{tpu_custom_call.1} parent=1 // pred_region
      %86 = vsyncadd [#allocation4], 0
      %s87 = sshll.u32 [#allocation7], 4
      %s88 = int_to_ptr.vmem [resolvable:$true] %s87
      %s89 = sshll.u32 %s2, 4
      %s90 = int_to_ptr.hbm [resolvable:$true] %s89
      %95 = dma.vmem_to_hbm [thread:$0]  %s88, 256, %s90, [#allocation4], 128, 128, 8
    $region21: #{tpu_custom_call.1} parent=1 // pred_fallthru
      _
    // Predicated region
    $region22: #{tpu_custom_call.1} parent=1 // pred_check
      _
    $region23: #{tpu_custom_call.1} parent=1 // pred_check_branch
      %97 = sbr.rel (0) target = $region25
    $region24: #{tpu_custom_call.1} parent=1 // pred_region
      %99 = dma.done [#allocation4], 256
    $region25: #{tpu_custom_call.1} parent=1 // pred_fallthru
      _
    %100 = vsyncpa [#allocation3], 1
    %101 = vsyncpa [#allocation6], 1
    %102 = vsyncpa [#allocation4], 1

</llo_original>
